<compile_context>
chip_gen: v7x
topology: tpu7x:2x2x1
jax: 0.10.0
libtpu: 0.0.40
codegen_flags: <defaults>
</compile_context>

<pallas_src>
import math

import jax
import jax.numpy as jnp
from jax import lax
from jax.experimental import pallas as pl
from jax.experimental.pallas import tpu as pltpu

_LANE = 128
_BF16_SUBLANE = 16  # bf16 sublane-packing multiple


def _round_up(x, m):
    return ((x + m - 1) // m) * m


def _gelu_exact(x):
    # nn.GELU default (approximate='none'): 0.5 * x * (1 + erf(x / sqrt(2)))
    return 0.5 * x * (1.0 + lax.erf(x * 0.7071067811865476))


def _tpu_kind_and_vmem():
    """Best-effort TPU generation string + physical VMEM bytes (safe fallbacks)."""
    kind = ""
    try:
        kind = jax.devices()[0].device_kind.lower()
    except Exception:  # pragma: no cover - defensive
        pass
    vmem = None
    try:
        vmem = int(pltpu.get_tpu_info().vmem_capacity_bytes)
    except Exception:  # pragma: no cover - defensive
        vmem = None
    if not vmem or vmem <= 0:
        vmem = (64 << 20) if "7" in kind else (128 << 20)
    return kind, vmem


def _default_tiles(kind, vmem_bytes):
    """Generation-tuned (tm, tk) maxima (multiples of 256 / 128)."""
    small_vmem = vmem_bytes <= (96 << 20)
    if "7" in kind or small_vmem:
        return 512, 256       # v7x-class: 64 MiB VMEM, 2x256^2 MXU
    if "v6" in kind:
        return 1024, 512      # v6e: big row tile to amortize weight streaming
    if "v5" in kind:
        return 512, 512       # v5e
    return 512, 512           # unknown: conservative


def _vmem_footprint(tm, dim_p, tk, tn, mxu_itemsize, out_itemsize):
    """Double-buffered I/O tiles + resident f32 accumulator, in bytes."""
    fp = 0
    fp += 2 * tm * dim_p * mxu_itemsize          # x rows (resident over n, k)
    fp += 2 * 2 * dim_p * tk * mxu_itemsize      # W1 h + g halves
    fp += 2 * 2 * tk * 4                         # b1 h + g halves (f32)
    fp += 2 * tk * tn * mxu_itemsize             # W2
    fp += 2 * tn * 4                             # b2 (f32)
    fp += 2 * tm * tn * out_itemsize             # output tile
    fp += tm * tn * 4                            # f32 accumulator scratch
    return fp


def feedforward_kernel(x_ref, w1h_ref, w1g_ref, b1h_ref, b1g_ref,
                       w2_ref, b2_ref, o_ref, acc_ref):
    # Grid: (row tiles i, dim_out tiles n, inner tiles k); k is the reduction axis (last).
    # x_ref:   (tm, dim_p)   bf16   resident across n, k
    # w1h/w1g: (dim_p, tk)   bf16
    # b1h/b1g: (1, tk)       f32
    # w2_ref:  (tk, tn)      bf16
    # b2_ref:  (1, tn)       f32
    # o_ref:   (tm, tn)      out dtype
    # acc_ref: (tm, tn)      f32 VMEM scratch
    k = pl.program_id(2)
    nk = pl.num_programs(2)
    is_last = k == nk - 1
    not_last = jnp.logical_not(is_last)

    x = x_ref[...]
    # GEGLU projection for this inner-dim tile (f32 MXU accumulation).
    h = jnp.dot(x, w1h_ref[...], preferred_element_type=jnp.float32) + b1h_ref[...]
    g = jnp.dot(x, w1g_ref[...], preferred_element_type=jnp.float32) + b1g_ref[...]
    geglu = h * _gelu_exact(g)
    # This inner-tile's contribution to the second matmul.
    partial = jnp.dot(geglu.astype(w2_ref.dtype), w2_ref[...],
                      preferred_element_type=jnp.float32)

    # Accumulate across k; fuse the last-k contribution straight into the output store.
    @pl.when(jnp.logical_and(k == 0, not_last))
    def _():
        acc_ref[...] = partial

    @pl.when(jnp.logical_and(k > 0, not_last))
    def _():
        acc_ref[...] += partial

    @pl.when(jnp.logical_and(is_last, k == 0))   # single-k case
    def _():
        o_ref[...] = (partial + b2_ref[...]).astype(o_ref.dtype)

    @pl.when(jnp.logical_and(is_last, k > 0))
    def _():
        o_ref[...] = (acc_ref[...] + partial + b2_ref[...]).astype(o_ref.dtype)


class FeedForwardPallas:
    """Pallas TPU FeedForward (GEGLU). Weight prep (split / pad / bf16 cast) is done once."""

    def __init__(self, w1, b1, w2, b2, *, mxu_dtype=jnp.bfloat16, tk=None, tn=None):
        dim, two_inner = w1.shape
        inner = two_inner // 2
        dim_out = w2.shape[1]
        assert w2.shape[0] == inner, "W2 rows must equal inner_dim"

        kind, vmem = _tpu_kind_and_vmem()
        tm_max, tk_def = _default_tiles(kind, vmem)
        mxu_itemsize = jnp.dtype(mxu_dtype).itemsize

        if tk is None:
            tk = tk_def
        tk = max(_LANE, min(tk, _round_up(inner, _LANE)))
        dim_p = _round_up(dim, _LANE)
        dim_out_p0 = _round_up(dim_out, _LANE)
        if tn is None:
            tn = dim_out_p0                      # single dim_out tile by default
        tn = max(_LANE, min(_round_up(tn, _LANE), dim_out_p0))

        # Shrink tn -> tk -> tm until the tile footprint fits ~0.8 x physical VMEM
        # (size with worst-case f32 outputs so the call-time path never re-pads weights).
        budget = int(0.8 * vmem)
        while _vmem_footprint(tm_max, dim_p, tk, tn, mxu_itemsize, 4) > budget:
            if tn > _LANE and tn >= tk:
                tn = max(_LANE, _round_up(tn // 2, _LANE))
            elif tk > _LANE:
                tk = max(_LANE, _round_up(tk // 2, _LANE))
            elif tm_max > _BF16_SUBLANE:
                tm_max = max(_BF16_SUBLANE, _round_up(tm_max // 2, _BF16_SUBLANE))
            else:
                break

        inner_p = _round_up(inner, tk)
        dim_out_p = _round_up(dim_out, tn)

        # One-time weight prep: split W1 into its h/g halves, zero-pad every axis to
        # lane-dense sizes, cast MXU operands to bf16 (biases stay f32). Zero padding is
        # exact: padded x rows are sliced off, padded W2 rows/cols and b2 entries are zero.
        self.w1h = jnp.pad(w1[:, :inner],
                           ((0, dim_p - dim), (0, inner_p - inner))).astype(mxu_dtype)
        self.w1g = jnp.pad(w1[:, inner:],
                           ((0, dim_p - dim), (0, inner_p - inner))).astype(mxu_dtype)
        self.b1h = jnp.pad(b1[:inner], (0, inner_p - inner)).reshape(1, inner_p).astype(jnp.float32)
        self.b1g = jnp.pad(b1[inner:], (0, inner_p - inner)).reshape(1, inner_p).astype(jnp.float32)
        self.w2 = jnp.pad(w2, ((0, inner_p - inner), (0, dim_out_p - dim_out))).astype(mxu_dtype)
        self.b2 = jnp.pad(b2, (0, dim_out_p - dim_out)).reshape(1, dim_out_p).astype(jnp.float32)

        self.dim, self.inner, self.dim_out = dim, inner, dim_out
        self.dim_p, self.inner_p, self.dim_out_p = dim_p, inner_p, dim_out_p
        self.tm_max, self.tk, self.tn = tm_max, tk, tn
        self.mxu_dtype = mxu_dtype
        self.mxu_itemsize = mxu_itemsize
        self.vmem_bytes = vmem
        self.vmem_budget = budget

    def __call__(self, hidden_states, scale: float = 1.0):
        # TODO(synk): LoRA path of LoRACompatibleLinear not implemented (no LoRA weights);
        # `scale` is a no-op, kept for signature parity with the PyTorch module.
        del scale
        lead = hidden_states.shape[:-1]
        dim = hidden_states.shape[-1]
        assert dim == self.dim
        M = int(math.prod(lead)) if lead else 1
        out_dtype = hidden_states.dtype
        out_itemsize = jnp.dtype(out_dtype).itemsize

        dim_p, inner_p, dim_out_p = self.dim_p, self.inner_p, self.dim_out_p
        tk, tn = self.tk, self.tn

        # Row tile: generation default (multiple of 256) clamped to the actual row count
        # rounded to the bf16 sublane multiple; shrink further if VMEM-limited.
        tm = min(self.tm_max, _round_up(M, _BF16_SUBLANE))
        while (tm > _BF16_SUBLANE and
               _vmem_footprint(tm, dim_p, tk, tn, self.mxu_itemsize, out_itemsize)
               > self.vmem_budget):
            tm = max(_BF16_SUBLANE, _round_up(tm // 2, _BF16_SUBLANE))
        M_p = _round_up(M, tm)

        x2d = jnp.pad(hidden_states.reshape(M, dim),
                      ((0, M_p - M), (0, dim_p - dim))).astype(self.mxu_dtype)

        grid = (M_p // tm, dim_out_p // tn, inner_p // tk)

        footprint = _vmem_footprint(tm, dim_p, tk, tn, self.mxu_itemsize, out_itemsize)
        # Estimate already includes double-buffering; cap at 0.85 x physical VMEM.
        vmem_limit = int(min(0.85 * self.vmem_bytes,
                             max(32 << 20, int(1.15 * footprint))))

        out_p = pl.pallas_call(
            feedforward_kernel,
            out_shape=jax.ShapeDtypeStruct((M_p, dim_out_p), out_dtype),
            grid=grid,
            in_specs=[
                pl.BlockSpec((tm, dim_p), lambda i, n, k: (i, 0)),   # x rows (resident)
                pl.BlockSpec((dim_p, tk), lambda i, n, k: (0, k)),   # W1 (h half)
                pl.BlockSpec((dim_p, tk), lambda i, n, k: (0, k)),   # W1 (g half)
                pl.BlockSpec((1, tk), lambda i, n, k: (0, k)),       # b1 (h half)
                pl.BlockSpec((1, tk), lambda i, n, k: (0, k)),       # b1 (g half)
                pl.BlockSpec((tk, tn), lambda i, n, k: (k, n)),      # W2
                pl.BlockSpec((1, tn), lambda i, n, k: (0, n)),       # b2
            ],
            out_specs=pl.BlockSpec((tm, tn), lambda i, n, k: (i, n)),
            scratch_shapes=[pltpu.VMEM((tm, tn), jnp.float32)],
            compiler_params=pltpu.CompilerParams(
                dimension_semantics=("parallel", "parallel", "arbitrary"),
                vmem_limit_bytes=vmem_limit),
        )(x2d, self.w1h, self.w1g, self.b1h, self.b1g, self.w2, self.b2)

        return out_p[:M, :self.dim_out].reshape(*lead, self.dim_out)


def feedforward_ref(hidden_states, w1, b1, w2, b2):
    proj = jnp.einsum("...d,de->...e", hidden_states, w1) + b1
    inner = w2.shape[0]
    h, g = proj[..., :inner], proj[..., inner:]
    geglu = h * (0.5 * g * (1.0 + lax.erf(g / jnp.sqrt(2.0).astype(g.dtype))))
    return jnp.einsum("...e,eo->...o", geglu, w2) + b2


if __name__ == "__main__":
    # Small shapes consistent with the module: dim=32, mult=4 -> inner_dim=128, dim_out=dim.
    B, S, dim = 2, 8, 32
    mult = 4
    inner_dim = dim * mult          # 128
    dim_out = dim                   # 32

    key = jax.random.PRNGKey(0)
    kx, k1, kb1, k2, kb2 = jax.random.split(key, 5)

    x = jax.random.normal(kx, (B, S, dim), dtype=jnp.float32)
    # GEGLU proj: Linear(dim, 2*inner_dim, bias=True)
    w1 = jax.random.normal(k1, (dim, 2 * inner_dim), dtype=jnp.float32) * 0.05
    b1 = jax.random.normal(kb1, (2 * inner_dim,), dtype=jnp.float32) * 0.02
    # Output: Linear(inner_dim, dim_out, bias=True)
    w2 = jax.random.normal(k2, (inner_dim, dim_out), dtype=jnp.float32) * 0.05
    b2 = jax.random.normal(kb2, (dim_out,), dtype=jnp.float32) * 0.02

    # One-time weight prep (hoisted out of the forward path), then forward.
    ff = FeedForwardPallas(w1, b1, w2, b2)
    out = ff(x)
    out = jax.block_until_ready(out)

    ref = feedforward_ref(x, w1, b1, w2, b2)
    assert out.shape == (B, S, dim_out)
    # bf16 MXU operands with f32 accumulation -> slightly looser tolerance vs f32 ref.
    assert jnp.allclose(out, ref, atol=2e-2, rtol=2e-2), "mismatch vs reference"

    print("KERNEL_OK")
</pallas_src>

<mosaic_0001>
module attributes {stable_mosaic.version = 11 : i64} {
  func.func @feedforward_kernel(%arg0: i32, %arg1: i32, %arg2: i32, %arg3: memref<16x128xbf16, #tpu.memory_space<vmem>>, %arg4: memref<128x128xbf16, #tpu.memory_space<vmem>>, %arg5: memref<128x128xbf16, #tpu.memory_space<vmem>>, %arg6: memref<1x128xf32, #tpu.memory_space<vmem>>, %arg7: memref<1x128xf32, #tpu.memory_space<vmem>>, %arg8: memref<128x128xbf16, #tpu.memory_space<vmem>>, %arg9: memref<1x128xf32, #tpu.memory_space<vmem>>, %arg10: memref<16x128xf32, #tpu.memory_space<vmem>>, %arg11: memref<16x128xf32, #tpu.memory_space<vmem>>) attributes {dimension_semantics = [#tpu.dimension_semantics<parallel>, #tpu.dimension_semantics<parallel>, #tpu.dimension_semantics<arbitrary>], iteration_bounds = array<i64: 1, 1, 1>, scalar_prefetch = 0 : i64, scratch_operands = 1 : i64, tpu.core_type = #tpu.core_type<tc>, window_params = [{transform_indices = @transform_0, window_bounds = array<i64: 16, 128>}, {transform_indices = @transform_1, window_bounds = array<i64: 128, 128>}, {transform_indices = @transform_2, window_bounds = array<i64: 128, 128>}, {transform_indices = @transform_3, window_bounds = array<i64: 1, 128>}, {transform_indices = @transform_4, window_bounds = array<i64: 1, 128>}, {transform_indices = @transform_5, window_bounds = array<i64: 128, 128>}, {transform_indices = @transform_6, window_bounds = array<i64: 1, 128>}, {transform_indices = @transform_7, window_bounds = array<i64: 16, 128>}]} {
    %c0_i32 = arith.constant 0 : i32
    %0 = arith.cmpi eq, %arg2, %c0_i32 : i32
    %true = arith.constant true
    %1 = arith.xori %0, %true : i1
    %c0 = arith.constant 0 : index
    %c0_0 = arith.constant 0 : index
    %2 = vector.load %arg3[%c0, %c0_0] : memref<16x128xbf16, #tpu.memory_space<vmem>>, vector<16x128xbf16>
    %c0_1 = arith.constant 0 : index
    %c0_2 = arith.constant 0 : index
    %3 = vector.load %arg4[%c0_1, %c0_2] : memref<128x128xbf16, #tpu.memory_space<vmem>>, vector<128x128xbf16>
    %cst = arith.constant dense<0.000000e+00> : vector<16x128xf32>
    %4 = tpu.matmul %2, %3, %cst {dimension_numbers = #tpu.dot_dimension_numbers<[1], [0], [0], [1], [0, 0, 1, 1], [], []>} : vector<16x128xbf16>, vector<128x128xbf16>, vector<16x128xf32> -> vector<16x128xf32>
    %c0_3 = arith.constant 0 : index
    %c0_4 = arith.constant 0 : index
    %5 = vector.load %arg6[%c0_3, %c0_4] : memref<1x128xf32, #tpu.memory_space<vmem>>, vector<1x128xf32>
    %6 = vector.broadcast %5 : vector<1x128xf32> to vector<16x128xf32>
    %7 = arith.addf %4, %6 : vector<16x128xf32>
    %c0_5 = arith.constant 0 : index
    %c0_6 = arith.constant 0 : index
    %8 = vector.load %arg5[%c0_5, %c0_6] : memref<128x128xbf16, #tpu.memory_space<vmem>>, vector<128x128xbf16>
    %cst_7 = arith.constant dense<0.000000e+00> : vector<16x128xf32>
    %9 = tpu.matmul %2, %8, %cst_7 {dimension_numbers = #tpu.dot_dimension_numbers<[1], [0], [0], [1], [0, 0, 1, 1], [], []>} : vector<16x128xbf16>, vector<128x128xbf16>, vector<16x128xf32> -> vector<16x128xf32>
    %c0_8 = arith.constant 0 : index
    %c0_9 = arith.constant 0 : index
    %10 = vector.load %arg7[%c0_8, %c0_9] : memref<1x128xf32, #tpu.memory_space<vmem>>, vector<1x128xf32>
    %11 = vector.broadcast %10 : vector<1x128xf32> to vector<16x128xf32>
    %12 = arith.addf %9, %11 : vector<16x128xf32>
    %cst_10 = arith.constant 5.000000e-01 : f32
    %13 = vector.broadcast %cst_10 : f32 to vector<16x128xf32>
    %14 = arith.mulf %13, %12 : vector<16x128xf32>
    %cst_11 = arith.constant 0.707106769 : f32
    %15 = vector.broadcast %cst_11 : f32 to vector<16x128xf32>
    %16 = arith.mulf %12, %15 : vector<16x128xf32>
    %17 = math.erf %16 : vector<16x128xf32>
    %cst_12 = arith.constant 1.000000e+00 : f32
    %18 = vector.broadcast %cst_12 : f32 to vector<16x128xf32>
    %19 = arith.addf %18, %17 : vector<16x128xf32>
    %20 = arith.mulf %14, %19 : vector<16x128xf32>
    %21 = arith.mulf %7, %20 : vector<16x128xf32>
    %22 = arith.truncf %21 : vector<16x128xf32> to vector<16x128xbf16>
    %c0_13 = arith.constant 0 : index
    %c0_14 = arith.constant 0 : index
    %23 = vector.load %arg8[%c0_13, %c0_14] : memref<128x128xbf16, #tpu.memory_space<vmem>>, vector<128x128xbf16>
    %cst_15 = arith.constant dense<0.000000e+00> : vector<16x128xf32>
    %24 = tpu.matmul %22, %23, %cst_15 {dimension_numbers = #tpu.dot_dimension_numbers<[1], [0], [0], [1], [0, 0, 1, 1], [], []>} : vector<16x128xbf16>, vector<128x128xbf16>, vector<16x128xf32> -> vector<16x128xf32>
    %c0_i32_16 = arith.constant 0 : i32
    %25 = arith.cmpi eq, %arg2, %c0_i32_16 : i32
    %26 = arith.andi %25, %1 : i1
    %27 = arith.extui %26 : i1 to i32
    %c0_i32_17 = arith.constant 0 : i32
    %28 = arith.cmpi ne, %27, %c0_i32_17 : i32
    scf.if %28 {
      %c0_24 = arith.constant 0 : index
      %c0_25 = arith.constant 0 : index
      %41 = vector.load %arg11[%c0_24, %c0_25] : memref<16x128xf32, #tpu.memory_space<vmem>>, vector<16x128xf32>
      tpu.vector_store %arg11[%c0_24, %c0_25], %24 {strides = array<i32>} : memref<16x128xf32, #tpu.memory_space<vmem>>, vector<16x128xf32>,
    } else {
    }
    %c0_i32_18 = arith.constant 0 : i32
    %29 = arith.cmpi sgt, %arg2, %c0_i32_18 : i32
    %30 = arith.andi %29, %1 : i1
    %31 = arith.extui %30 : i1 to i32
    %c0_i32_19 = arith.constant 0 : i32
    %32 = arith.cmpi ne, %31, %c0_i32_19 : i32
    scf.if %32 {
      %c0_24 = arith.constant 0 : index
      %c0_25 = arith.constant 0 : index
      %41 = vector.load %arg11[%c0_24, %c0_25] : memref<16x128xf32, #tpu.memory_space<vmem>>, vector<16x128xf32>
      %42 = arith.addf %41, %24 : vector<16x128xf32>
      %c0_26 = arith.constant 0 : index
      %c0_27 = arith.constant 0 : index
      %43 = vector.load %arg11[%c0_26, %c0_27] : memref<16x128xf32, #tpu.memory_space<vmem>>, vector<16x128xf32>
      tpu.vector_store %arg11[%c0_26, %c0_27], %42 {strides = array<i32>} : memref<16x128xf32, #tpu.memory_space<vmem>>, vector<16x128xf32>,
    } else {
    }
    %c0_i32_20 = arith.constant 0 : i32
    %33 = arith.cmpi eq, %arg2, %c0_i32_20 : i32
    %34 = arith.andi %0, %33 : i1
    %35 = arith.extui %34 : i1 to i32
    %c0_i32_21 = arith.constant 0 : i32
    %36 = arith.cmpi ne, %35, %c0_i32_21 : i32
    scf.if %36 {
      %c0_24 = arith.constant 0 : index
      %c0_25 = arith.constant 0 : index
      %41 = vector.load %arg9[%c0_24, %c0_25] : memref<1x128xf32, #tpu.memory_space<vmem>>, vector<1x128xf32>
      %42 = vector.broadcast %41 : vector<1x128xf32> to vector<16x128xf32>
      %43 = arith.addf %24, %42 : vector<16x128xf32>
      %c0_26 = arith.constant 0 : index
      %c0_27 = arith.constant 0 : index
      %44 = vector.load %arg10[%c0_26, %c0_27] : memref<16x128xf32, #tpu.memory_space<vmem>>, vector<16x128xf32>
      tpu.vector_store %arg10[%c0_26, %c0_27], %43 {strides = array<i32>} : memref<16x128xf32, #tpu.memory_space<vmem>>, vector<16x128xf32>,
    } else {
    }
    %c0_i32_22 = arith.constant 0 : i32
    %37 = arith.cmpi sgt, %arg2, %c0_i32_22 : i32
    %38 = arith.andi %0, %37 : i1
    %39 = arith.extui %38 : i1 to i32
    %c0_i32_23 = arith.constant 0 : i32
    %40 = arith.cmpi ne, %39, %c0_i32_23 : i32
    scf.if %40 {
      %c0_24 = arith.constant 0 : index
      %c0_25 = arith.constant 0 : index
      %41 = vector.load %arg11[%c0_24, %c0_25] : memref<16x128xf32, #tpu.memory_space<vmem>>, vector<16x128xf32>
      %42 = arith.addf %41, %24 : vector<16x128xf32>
      %c0_26 = arith.constant 0 : index
      %c0_27 = arith.constant 0 : index
      %43 = vector.load %arg9[%c0_26, %c0_27] : memref<1x128xf32, #tpu.memory_space<vmem>>, vector<1x128xf32>
      %44 = vector.broadcast %43 : vector<1x128xf32> to vector<16x128xf32>
      %45 = arith.addf %42, %44 : vector<16x128xf32>
      %c0_28 = arith.constant 0 : index
      %c0_29 = arith.constant 0 : index
      %46 = vector.load %arg10[%c0_28, %c0_29] : memref<16x128xf32, #tpu.memory_space<vmem>>, vector<16x128xf32>
      tpu.vector_store %arg10[%c0_28, %c0_29], %45 {strides = array<i32>} : memref<16x128xf32, #tpu.memory_space<vmem>>, vector<16x128xf32>,
    } else {
    }
    return
  }
  func.func @transform_0(%arg0: i32, %arg1: i32, %arg2: i32) -> (i32, i32) {
    %c0_i32 = arith.constant 0 : i32
    %c0_i32_0 = arith.constant 0 : i32
    return %arg0, %c0_i32 : i32, i32
  }
  func.func @transform_1(%arg0: i32, %arg1: i32, %arg2: i32) -> (i32, i32) {
    %c0_i32 = arith.constant 0 : i32
    %c0_i32_0 = arith.constant 0 : i32
    return %c0_i32, %arg2 : i32, i32
  }
  func.func @transform_2(%arg0: i32, %arg1: i32, %arg2: i32) -> (i32, i32) {
    %c0_i32 = arith.constant 0 : i32
    %c0_i32_0 = arith.constant 0 : i32
    return %c0_i32, %arg2 : i32, i32
  }
  func.func @transform_3(%arg0: i32, %arg1: i32, %arg2: i32) -> (i32, i32) {
    %c0_i32 = arith.constant 0 : i32
    %c0_i32_0 = arith.constant 0 : i32
    return %c0_i32, %arg2 : i32, i32
  }
  func.func @transform_4(%arg0: i32, %arg1: i32, %arg2: i32) -> (i32, i32) {
    %c0_i32 = arith.constant 0 : i32
    %c0_i32_0 = arith.constant 0 : i32
    return %c0_i32, %arg2 : i32, i32
  }
  func.func @transform_5(%arg0: i32, %arg1: i32, %arg2: i32) -> (i32, i32) {
    %c0_i32 = arith.constant 0 : i32
    return %arg2, %arg1 : i32, i32
  }
  func.func @transform_6(%arg0: i32, %arg1: i32, %arg2: i32) -> (i32, i32) {
    %c0_i32 = arith.constant 0 : i32
    %c0_i32_0 = arith.constant 0 : i32
    return %c0_i32, %arg1 : i32, i32
  }
  func.func @transform_7(%arg0: i32, %arg1: i32, %arg2: i32) -> (i32, i32) {
    %c0_i32 = arith.constant 0 : i32
    return %arg0, %arg1 : i32, i32
  }
}

</mosaic_0001>

<llo_original>
// kernel: tpu_custom_call.1
$region0: #{tpu_custom_call.1}
  #allocation0 [shape = 'u32[]', space=smem, size = 0x4, offset = 0x4, fixed_abs, tag = 'smem constant byte address 0x4 - core index']
  #allocation1 [shape = 'u32[144,128]{1,0:T(1,128)}', space=vmem, size = 0x12000, scoped, tag = 'internal scratch']
  #allocation2 [shape = 'f32[16,128]{1,0:T(8,128)}', space=vmem, size = 0x2000, scoped, tag = 'scratch operand']
  %s0 = inlined_call_operand.hbm [shape: bf16[16,128], index: 0, kind: input, shape index: {}]
  %s1 = inlined_call_operand.hbm [shape: bf16[128,128], index: 1, kind: input, shape index: {}]
  %s2 = inlined_call_operand.hbm [shape: bf16[128,128], index: 2, kind: input, shape index: {}]
  %s3 = inlined_call_operand.vmem [shape: f32[1,128], index: 3, kind: input, shape index: {}]
  %s4 = inlined_call_operand.vmem [shape: f32[1,128], index: 4, kind: input, shape index: {}]
  %s5 = inlined_call_operand.hbm [shape: bf16[128,128], index: 5, kind: input, shape index: {}]
  %s6 = inlined_call_operand.vmem [shape: f32[1,128], index: 6, kind: input, shape index: {}]
  %s7 = inlined_call_operand.hbm [shape: f32[16,128], index: 7, kind: output, shape index: {}]
  %s8 = sld [smem:[#allocation0]]
  $region70: #{tpu_custom_call.1} parent=0
    _
  %s10 = ssub.s32 1, %s8
  %s11 = scalar_select 0, %s10, %s8
  $region1: #{tpu_custom_call.1} parent=0
    #allocation3 [shape = 'u8[4096]{0}', space=vmem, size = 0x1000, scoped, tag = 'input window, operand 0, single buffered']
    #allocation4 [shape = 's32[1]{0}', space=sflag, size = 0x4, scoped, tag = 'scoped memory for tpu_custom_call.1']
    #allocation5 [shape = 's32[1]{0}', space=sflag, size = 0x4, scoped, tag = 'scoped memory for tpu_custom_call.1']
    #allocation6 [shape = 'u8[32768]{0}', space=vmem, size = 0x8000, scoped, tag = 'input window, operand 1, single buffered']
    #allocation7 [shape = 's32[1]{0}', space=sflag, size = 0x4, scoped, tag = 'scoped memory for tpu_custom_call.1']
    #allocation8 [shape = 'u8[32768]{0}', space=vmem, size = 0x8000, scoped, tag = 'input window, operand 2, single buffered']
    #allocation9 [shape = 'u8[32768]{0}', space=vmem, size = 0x8000, scoped, tag = 'input window, operand 5, single buffered']
    #allocation10 [shape = 's32[1]{0}', space=sflag, size = 0x4, scoped, tag = 'scoped memory for tpu_custom_call.1']
    #allocation11 [shape = 'u8[8192]{0}', space=vmem, size = 0x2000, scoped, tag = 'output window, operand 0, single buffered']
    %12 = vsyncpa [#allocation4], 0
    %13 = vsyncpa [#allocation7], 0
    %14 = vsyncpa [#allocation10], 0
    %15 = vsyncpa [#allocation5], 0
    // Predicated region
    $region2: #{tpu_custom_call.1} parent=1 // pred_check
      _
    $region3: #{tpu_custom_call.1} parent=1 // pred_check_branch
      %17 = sbr.rel (0) target = $region5
    $region4: #{tpu_custom_call.1} parent=1 // pred_region
      %s19 = ssub.s32 128, 128
      %20 = vsyncadd [#allocation4], %s19
      %s21 = sshll.u32 [#allocation3], 4
      %s22 = int_to_ptr.vmem [resolvable:$true] %s21
      %27 = dma.hbm_to_vmem [thread:$0]  %s0, 128, %s22, [#allocation4], 64, 64, 4
    $region5: #{tpu_custom_call.1} parent=1 // pred_fallthru
      _
    // Predicated region
    $region6: #{tpu_custom_call.1} parent=1 // pred_check
      _
    $region7: #{tpu_custom_call.1} parent=1 // pred_check_branch
      %29 = sbr.rel (0) target = $region9
    $region8: #{tpu_custom_call.1} parent=1 // pred_region
      %s31 = ssub.s32 1024, 1024
      %32 = vsyncadd [#allocation7], %s31
      %s33 = sshll.u32 [#allocation6], 4
      %s34 = int_to_ptr.vmem [resolvable:$true] %s33
      %39 = dma.hbm_to_vmem [thread:$0]  %s1, 1024, %s34, [#allocation7], 64, 64, 4
    $region9: #{tpu_custom_call.1} parent=1 // pred_fallthru
      _
    // Predicated region
    $region10: #{tpu_custom_call.1} parent=1 // pred_check
      _
    $region11: #{tpu_custom_call.1} parent=1 // pred_check_branch
      %41 = sbr.rel (0) target = $region13
    $region12: #{tpu_custom_call.1} parent=1 // pred_region
      %s43 = ssub.s32 1024, 1024
      %44 = vsyncadd [#allocation7], %s43
      %s45 = sshll.u32 [#allocation8], 4
      %s46 = int_to_ptr.vmem [resolvable:$true] %s45
      %51 = dma.hbm_to_vmem [thread:$0]  %s2, 1024, %s46, [#allocation7], 64, 64, 4
    $region13: #{tpu_custom_call.1} parent=1 // pred_fallthru
      _
    // Predicated region
    $region14: #{tpu_custom_call.1} parent=1 // pred_check
      _
    $region15: #{tpu_custom_call.1} parent=1 // pred_check_branch
      %53 = sbr.rel (0) target = $region17
    $region16: #{tpu_custom_call.1} parent=1 // pred_region
      _
    $region17: #{tpu_custom_call.1} parent=1 // pred_fallthru
      _
    // Predicated region
    $region18: #{tpu_custom_call.1} parent=1 // pred_check
      _
    $region19: #{tpu_custom_call.1} parent=1 // pred_check_branch
      %55 = sbr.rel (0) target = $region21
    $region20: #{tpu_custom_call.1} parent=1 // pred_region
      _
    $region21: #{tpu_custom_call.1} parent=1 // pred_fallthru
      _
    // Predicated region
    $region22: #{tpu_custom_call.1} parent=1 // pred_check
      _
    $region23: #{tpu_custom_call.1} parent=1 // pred_check_branch
      %57 = sbr.rel (0) target = $region25
    $region24: #{tpu_custom_call.1} parent=1 // pred_region
      %s59 = ssub.s32 1024, 1024
      %60 = vsyncadd [#allocation10], %s59
      %s61 = sshll.u32 [#allocation9], 4
      %s62 = int_to_ptr.vmem [resolvable:$true] %s61
      %67 = dma.hbm_to_vmem [thread:$0]  %s5, 1024, %s62, [#allocation10], 64, 64, 4
    $region25: #{tpu_custom_call.1} parent=1 // pred_fallthru
      _
    // Predicated region
    $region26: #{tpu_custom_call.1} parent=1 // pred_check
      _
    $region27: #{tpu_custom_call.1} parent=1 // pred_check_branch
      %69 = sbr.rel (0) target = $region29
    $region28: #{tpu_custom_call.1} parent=1 // pred_region
      _
    $region29: #{tpu_custom_call.1} parent=1 // pred_fallthru
      _
    // Predicated region
    $region30: #{tpu_custom_call.1} parent=1 // pred_check
      _
    $region31: #{tpu_custom_call.1} parent=1 // pred_check_branch
      %71 = sbr.rel (0) target = $region33
    $region32: #{tpu_custom_call.1} parent=1 // pred_region
      %72 = dma.done [#allocation4], 128
    $region33: #{tpu_custom_call.1} parent=1 // pred_fallthru
      _
    // Predicated region
    $region34: #{tpu_custom_call.1} parent=1 // pred_check
      _
    $region35: #{tpu_custom_call.1} parent=1 // pred_check_branch
      %74 = sbr.rel (0) target = $region37
    $region36: #{tpu_custom_call.1} parent=1 // pred_region
      %75 = dma.done [#allocation7], 1024
    $region37: #{tpu_custom_call.1} parent=1 // pred_fallthru
      _
    // Predicated region
    $region38: #{tpu_custom_call.1} parent=1 // pred_check
      _
    $region39: #{tpu_custom_call.1} parent=1 // pred_check_branch
      %77 = sbr.rel (0) target = $region41
    $region40: #{tpu_custom_call.1} parent=1 // pred_region
      %78 = dma.done [#allocation7], 1024
    $region41: #{tpu_custom_call.1} parent=1 // pred_fallthru
      _
    // Predicated region
    $region42: #{tpu_custom_call.1} parent=1 // pred_check
      _
    $region43: #{tpu_custom_call.1} parent=1 // pred_check_branch
      %80 = sbr.rel (0) target = $region45
    $region44: #{tpu_custom_call.1} parent=1 // pred_region
      %81 = dma.done [#allocation10], 1024
    $region45: #{tpu_custom_call.1} parent=1 // pred_fallthru
      _
    %p83 = scmp.eq.s32.totalorder 0, 0
    %p84 = scmp.ne.s32.totalorder 0, 0
    %v85 = vld [vmem:[#allocation3] sm:$0xf]
    %v86 = vld [vmem:[#allocation3 + $0x4] sm:$0xf]
    %v87 = vld [vmem:[#allocation6] sm:$0xf]
    %v88 = vld [vmem:[#allocation6 + $0x4] sm:$0xf]
    %v89 = vld [vmem:[#allocation6 + $0x8] sm:$0xf]
    %v90 = vld [vmem:[#allocation6 + $0xc] sm:$0xf]
    %v91 = vld [vmem:[#allocation6 + $0x10] sm:$0xf]
    %v92 = vld [vmem:[#allocation6 + $0x14] sm:$0xf]
    %v93 = vld [vmem:[#allocation6 + $0x18] sm:$0xf]
    %v94 = vld [vmem:[#allocation6 + $0x1c] sm:$0xf]
    %v95 = vld [vmem:[#allocation6 + $0x20] sm:$0xf]
    %v96 = vld [vmem:[#allocation6 + $0x24] sm:$0xf]
    %v97 = vld [vmem:[#allocation6 + $0x28] sm:$0xf]
    %v98 = vld [vmem:[#allocation6 + $0x2c] sm:$0xf]
    %v99 = vld [vmem:[#allocation6 + $0x30] sm:$0xf]
    %v100 = vld [vmem:[#allocation6 + $0x34] sm:$0xf]
    %v101 = vld [vmem:[#allocation6 + $0x38] sm:$0xf]
    %v102 = vld [vmem:[#allocation6 + $0x3c] sm:$0xf]
    %v103 = vld [vmem:[%s3] sm:$0x1]
    %v105 = vlaneseq
    %v106 = vshrl.u32 %v105, 7
    %v107 = vsub.s32 0, %v106
    %v108 = vrot.slane %v103, %v107
    %v112 = vunpack.c.l.b16 %v85
    %v113 = vunpack.c.l.b16 %v86
    %v114 = vpack.c.b16 %v113, %v112
    %v132 = vunpack.c.l.b16 %v87
    %v133 = vunpack.c.l.b16 %v88
    %v134 = vunpack.c.l.b16 %v89
    %v135 = vunpack.c.l.b16 %v90
    %v136 = vunpack.c.l.b16 %v91
    %v137 = vunpack.c.l.b16 %v92
    %v138 = vunpack.c.l.b16 %v93
    %v139 = vunpack.c.l.b16 %v94
    %v140 = vunpack.c.l.b16 %v95
    %v141 = vunpack.c.l.b16 %v96
    %v142 = vunpack.c.l.b16 %v97
    %v143 = vunpack.c.l.b16 %v98
    %v144 = vunpack.c.l.b16 %v99
    %v145 = vunpack.c.l.b16 %v100
    %v146 = vunpack.c.l.b16 %v101
    %v147 = vunpack.c.l.b16 %v102
    %v148 = vpack.c.b16 %v133, %v132
    %v149 = vpack.c.b16 %v135, %v134
    %v150 = vpack.c.b16 %v137, %v136
    %v151 = vpack.c.b16 %v139, %v138
    %v152 = vpack.c.b16 %v141, %v140
    %v153 = vpack.c.b16 %v143, %v142
    %v154 = vpack.c.b16 %v145, %v144
    %v155 = vpack.c.b16 %v147, %v146
    %164 = vmatprep.subr.bf16.mxu0 0
    %165 = vmatpush1.bf16.msra.mxu0 %v148
    %166 = vmatprep.subr.bf16.mxu0 0
    %167 = vmatpush1.bf16.msra.mxu0 %v149
    %168 = vmatprep.subr.bf16.mxu0 0
    %169 = vmatpush1.bf16.msra.mxu0 %v150
    %170 = vmatprep.subr.bf16.mxu0 0
    %171 = vmatpush1.bf16.msra.mxu0 %v151
    %172 = vmatprep.subr.bf16.mxu0 0
    %173 = vmatpush1.bf16.msra.mxu0 %v152
    %174 = vmatprep.subr.bf16.mxu0 0
    %175 = vmatpush1.bf16.msra.mxu0 %v153
    %176 = vmatprep.subr.bf16.mxu0 0
    %177 = vmatpush1.bf16.msra.mxu0 %v154
    %178 = vmatprep.subr.bf16.mxu0 0
    %179 = vmatpush1.bf16.msra.mxu0 %v155
    %180 = vmatprep.subr.bf16.mxu0 0
    %181 = vmatpush1.bf16.msra.mxu0 0
    %182 = vmatprep.subr.bf16.mxu0 0
    %183 = vmatpush1.bf16.msra.mxu0 0
    %184 = vmatprep.subr.bf16.mxu0 0
    %185 = vmatpush1.bf16.msra.mxu0 0
    %186 = vmatprep.subr.bf16.mxu0 0
    %187 = vmatpush1.bf16.msra.mxu0 0
    %188 = vmatprep.subr.bf16.mxu0 0
    %189 = vmatpush1.bf16.msra.mxu0 0
    %190 = vmatprep.subr.bf16.mxu0 0
    %191 = vmatpush1.bf16.msra.mxu0 0
    %192 = vmatprep.subr.bf16.mxu0 0
    %193 = vmatpush1.bf16.msra.mxu0 0
    %194 = vmatprep.subr.bf16.mxu0 0
    %195 = vmatpush1.bf16.msra.mxu0 0
    %196 = vmatprep.mubr.bf16.mxu0 0
    %197 = vmatmul.mubr.bf16.gmra.mrb[0].mxu0 %v114
    %v198 = vpop.f32.mrb[0].mxu0
    %v199 = vadd.f32 %v108, %v198
    %v200 = vpop.f32.mrb[0].mxu0
    %v201 = vpop.f32.mrb[0].mxu0
    %v202 = vadd.f32 %v108, %v201
    %v203 = vpop.f32.mrb[0].mxu0
    %204 = vdwg.mxu0
    %v205 = vld [vmem:[#allocation8] sm:$0xf]
    %v206 = vld [vmem:[#allocation8 + $0x4] sm:$0xf]
    %v207 = vld [vmem:[#allocation8 + $0x8] sm:$0xf]
    %v208 = vld [vmem:[#allocation8 + $0xc] sm:$0xf]
    %v209 = vld [vmem:[#allocation8 + $0x10] sm:$0xf]
    %v210 = vld [vmem:[#allocation8 + $0x14] sm:$0xf]
    %v211 = vld [vmem:[#allocation8 + $0x18] sm:$0xf]
    %v212 = vld [vmem:[#allocation8 + $0x1c] sm:$0xf]
    %v213 = vld [vmem:[#allocation8 + $0x20] sm:$0xf]
    %v214 = vld [vmem:[#allocation8 + $0x24] sm:$0xf]
    %v215 = vld [vmem:[#allocation8 + $0x28] sm:$0xf]
    %v216 = vld [vmem:[#allocation8 + $0x2c] sm:$0xf]
    %v217 = vld [vmem:[#allocation8 + $0x30] sm:$0xf]
    %v218 = vld [vmem:[#allocation8 + $0x34] sm:$0xf]
    %v219 = vld [vmem:[#allocation8 + $0x38] sm:$0xf]
    %v220 = vld [vmem:[#allocation8 + $0x3c] sm:$0xf]
    %v221 = vld [vmem:[%s4] sm:$0x1]
    %v223 = vlaneseq
    %v224 = vshrl.u32 %v223, 7
    %v225 = vsub.s32 0, %v224
    %v226 = vrot.slane %v221, %v225
    %v244 = vunpack.c.l.b16 %v205
    %v245 = vunpack.c.l.b16 %v206
    %v246 = vunpack.c.l.b16 %v207
    %v247 = vunpack.c.l.b16 %v208
    %v248 = vunpack.c.l.b16 %v209
    %v249 = vunpack.c.l.b16 %v210
    %v250 = vunpack.c.l.b16 %v211
    %v251 = vunpack.c.l.b16 %v212
    %v252 = vunpack.c.l.b16 %v213
    %v253 = vunpack.c.l.b16 %v214
    %v254 = vunpack.c.l.b16 %v215
    %v255 = vunpack.c.l.b16 %v216
    %v256 = vunpack.c.l.b16 %v217
    %v257 = vunpack.c.l.b16 %v218
    %v258 = vunpack.c.l.b16 %v219
    %v259 = vunpack.c.l.b16 %v220
    %v260 = vpack.c.b16 %v245, %v244
    %v261 = vpack.c.b16 %v247, %v246
    %v262 = vpack.c.b16 %v249, %v248
    %v263 = vpack.c.b16 %v251, %v250
    %v264 = vpack.c.b16 %v253, %v252
    %v265 = vpack.c.b16 %v255, %v254
    %v266 = vpack.c.b16 %v257, %v256
    %v267 = vpack.c.b16 %v259, %v258
    %276 = vmatprep.subr.bf16.mxu0 0
    %277 = vmatpush1.bf16.msra.mxu0 %v260
    %278 = vmatprep.subr.bf16.mxu0 0
    %279 = vmatpush1.bf16.msra.mxu0 %v261
    %280 = vmatprep.subr.bf16.mxu0 0
    %281 = vmatpush1.bf16.msra.mxu0 %v262
    %282 = vmatprep.subr.bf16.mxu0 0
    %283 = vmatpush1.bf16.msra.mxu0 %v263
    %284 = vmatprep.subr.bf16.mxu0 0
    %285 = vmatpush1.bf16.msra.mxu0 %v264
    %286 = vmatprep.subr.bf16.mxu0 0
    %287 = vmatpush1.bf16.msra.mxu0 %v265
    %288 = vmatprep.subr.bf16.mxu0 0
    %289 = vmatpush1.bf16.msra.mxu0 %v266
    %290 = vmatprep.subr.bf16.mxu0 0
    %291 = vmatpush1.bf16.msra.mxu0 %v267
    %292 = vmatprep.subr.bf16.mxu0 0
    %293 = vmatpush1.bf16.msra.mxu0 0
    %294 = vmatprep.subr.bf16.mxu0 0
    %295 = vmatpush1.bf16.msra.mxu0 0
    %296 = vmatprep.subr.bf16.mxu0 0
    %297 = vmatpush1.bf16.msra.mxu0 0
    %298 = vmatprep.subr.bf16.mxu0 0
    %299 = vmatpush1.bf16.msra.mxu0 0
    %300 = vmatprep.subr.bf16.mxu0 0
    %301 = vmatpush1.bf16.msra.mxu0 0
    %302 = vmatprep.subr.bf16.mxu0 0
    %303 = vmatpush1.bf16.msra.mxu0 0
    %304 = vmatprep.subr.bf16.mxu0 0
    %305 = vmatpush1.bf16.msra.mxu0 0
    %306 = vmatprep.subr.bf16.mxu0 0
    %307 = vmatpush1.bf16.msra.mxu0 0
    %308 = vmatprep.mubr.bf16.mxu0 0
    %309 = vmatmul.mubr.bf16.gmra.mrb[0].mxu0 %v114
    %v310 = vpop.f32.mrb[0].mxu0
    %v311 = vadd.f32 %v226, %v310
    %v312 = vpop.f32.mrb[0].mxu0
    %v313 = vpop.f32.mrb[0].mxu0
    %v314 = vadd.f32 %v226, %v313
    %v315 = vpop.f32.mrb[0].mxu0
    %316 = vdwg.mxu0
    %v317 = vmul.f32 %v311, 0.5
    %v318 = vmul.f32 %v314, 0.5
    %v319 = vmul.f32 %v311, 0.70710677
    %v320 = vmul.f32 %v314, 0.70710677
    %v321 = verf.f32.pop %v319
    %v322 = verf.f32.pop %v320
    %v323 = vadd.f32 %v321, 1.0
    %v324 = vadd.f32 %v322, 1.0
    %v325 = vmul.f32 %v317, %v323
    %v326 = vmul.f32 %v318, %v324
    %v327 = vmul.f32 %v199, %v325
    %v328 = vmul.f32 %v202, %v326
    %v329 = vpack.c.bf16 %v328, %v327
    %v330 = vld [vmem:[#allocation9] sm:$0xf]
    %v331 = vld [vmem:[#allocation9 + $0x4] sm:$0xf]
    %v332 = vld [vmem:[#allocation9 + $0x8] sm:$0xf]
    %v333 = vld [vmem:[#allocation9 + $0xc] sm:$0xf]
    %v334 = vld [vmem:[#allocation9 + $0x10] sm:$0xf]
    %v335 = vld [vmem:[#allocation9 + $0x14] sm:$0xf]
    %v336 = vld [vmem:[#allocation9 + $0x18] sm:$0xf]
    %v337 = vld [vmem:[#allocation9 + $0x1c] sm:$0xf]
    %v338 = vld [vmem:[#allocation9 + $0x20] sm:$0xf]
    %v339 = vld [vmem:[#allocation9 + $0x24] sm:$0xf]
    %v340 = vld [vmem:[#allocation9 + $0x28] sm:$0xf]
    %v341 = vld [vmem:[#allocation9 + $0x2c] sm:$0xf]
    %v342 = vld [vmem:[#allocation9 + $0x30] sm:$0xf]
    %v343 = vld [vmem:[#allocation9 + $0x34] sm:$0xf]
    %v344 = vld [vmem:[#allocation9 + $0x38] sm:$0xf]
    %v345 = vld [vmem:[#allocation9 + $0x3c] sm:$0xf]
    %v362 = vunpack.c.l.b16 %v330
    %v363 = vunpack.c.l.b16 %v331
    %v364 = vunpack.c.l.b16 %v332
    %v365 = vunpack.c.l.b16 %v333
    %v366 = vunpack.c.l.b16 %v334
    %v367 = vunpack.c.l.b16 %v335
    %v368 = vunpack.c.l.b16 %v336
    %v369 = vunpack.c.l.b16 %v337
    %v370 = vunpack.c.l.b16 %v338
    %v371 = vunpack.c.l.b16 %v339
    %v372 = vunpack.c.l.b16 %v340
    %v373 = vunpack.c.l.b16 %v341
    %v374 = vunpack.c.l.b16 %v342
    %v375 = vunpack.c.l.b16 %v343
    %v376 = vunpack.c.l.b16 %v344
    %v377 = vunpack.c.l.b16 %v345
    %v378 = vpack.c.b16 %v363, %v362
    %v379 = vpack.c.b16 %v365, %v364
    %v380 = vpack.c.b16 %v367, %v366
    %v381 = vpack.c.b16 %v369, %v368
    %v382 = vpack.c.b16 %v371, %v370
    %v383 = vpack.c.b16 %v373, %v372
    %v384 = vpack.c.b16 %v375, %v374
    %v385 = vpack.c.b16 %v377, %v376
    %394 = vmatprep.subr.bf16.mxu0 0
    %395 = vmatpush1.bf16.msra.mxu0 %v378
    %396 = vmatprep.subr.bf16.mxu0 0
    %397 = vmatpush1.bf16.msra.mxu0 %v379
    %398 = vmatprep.subr.bf16.mxu0 0
    %399 = vmatpush1.bf16.msra.mxu0 %v380
    %400 = vmatprep.subr.bf16.mxu0 0
    %401 = vmatpush1.bf16.msra.mxu0 %v381
    %402 = vmatprep.subr.bf16.mxu0 0
    %403 = vmatpush1.bf16.msra.mxu0 %v382
    %404 = vmatprep.subr.bf16.mxu0 0
    %405 = vmatpush1.bf16.msra.mxu0 %v383
    %406 = vmatprep.subr.bf16.mxu0 0
    %407 = vmatpush1.bf16.msra.mxu0 %v384
    %408 = vmatprep.subr.bf16.mxu0 0
    %409 = vmatpush1.bf16.msra.mxu0 %v385
    %410 = vmatprep.subr.bf16.mxu0 0
    %411 = vmatpush1.bf16.msra.mxu0 0
    %412 = vmatprep.subr.bf16.mxu0 0
    %413 = vmatpush1.bf16.msra.mxu0 0
    %414 = vmatprep.subr.bf16.mxu0 0
    %415 = vmatpush1.bf16.msra.mxu0 0
    %416 = vmatprep.subr.bf16.mxu0 0
    %417 = vmatpush1.bf16.msra.mxu0 0
    %418 = vmatprep.subr.bf16.mxu0 0
    %419 = vmatpush1.bf16.msra.mxu0 0
    %420 = vmatprep.subr.bf16.mxu0 0
    %421 = vmatpush1.bf16.msra.mxu0 0
    %422 = vmatprep.subr.bf16.mxu0 0
    %423 = vmatpush1.bf16.msra.mxu0 0
    %424 = vmatprep.subr.bf16.mxu0 0
    %425 = vmatpush1.bf16.msra.mxu0 0
    %426 = vmatprep.mubr.bf16.mxu0 0
    %427 = vmatmul.mubr.bf16.gmra.mrb[0].mxu0 %v329
    %v428 = vpop.f32.mrb[0].mxu0
    %v429 = vadd.f32 0.0, %v428
    %v430 = vpop.f32.mrb[0].mxu0
    %v431 = vpop.f32.mrb[0].mxu0
    %v432 = vadd.f32 0.0, %v431
    %v433 = vpop.f32.mrb[0].mxu0
    %434 = vdwg.mxu0
    %p435 = pnand %p83, %p84
    %p436 = pneg %p435
    // Predicated region
    $region46: #{tpu_custom_call.1} parent=1 // pred_check
      _
    $region47: #{tpu_custom_call.1} parent=1 // pred_check_branch
      %438 = sbr.rel (%p435) target = $region49
    $region48: #{tpu_custom_call.1} parent=1 // pred_region
      %439 = vst [vmem:[#allocation2] sm:$0xff] %v429
      %440 = vst [vmem:[#allocation2 + $0x8] sm:$0xff] %v432
    $region49: #{tpu_custom_call.1} parent=1 // pred_fallthru
      _
    %p441 = scmp.gt.s32.totalorder 0, 0
    %p442 = pnand %p441, %p84
    %p443 = pneg %p442
    // Predicated region
    $region50: #{tpu_custom_call.1} parent=1 // pred_check
      _
    $region51: #{tpu_custom_call.1} parent=1 // pred_check_branch
      %445 = sbr.rel (%p442) target = $region53
    $region52: #{tpu_custom_call.1} parent=1 // pred_region
      %v446 = vld [vmem:[#allocation2] sm:$0xff]
      %v447 = vld [vmem:[#allocation2 + $0x8] sm:$0xff]
      %v448 = vadd.f32 %v446, %v429
      %v449 = vadd.f32 %v447, %v432
      %450 = vst [vmem:[#allocation2] sm:$0xff] %v448
      %451 = vst [vmem:[#allocation2 + $0x8] sm:$0xff] %v449
    $region53: #{tpu_custom_call.1} parent=1 // pred_fallthru
      _
    // Predicated region
    $region54: #{tpu_custom_call.1} parent=1 // pred_check
      %p452 = pneg %p83
    $region55: #{tpu_custom_call.1} parent=1 // pred_check_branch
      %454 = sbr.rel (%p452) target = $region57
    $region56: #{tpu_custom_call.1} parent=1 // pred_region
      %v455 = vld [vmem:[%s6] sm:$0x1]
      %v457 = vlaneseq
      %v458 = vshrl.u32 %v457, 7
      %v459 = vsub.s32 0, %v458
      %v460 = vrot.slane %v455, %v459
      %v462 = vadd.f32 %v429, %v460
      %v463 = vadd.f32 %v432, %v460
      %464 = vst [vmem:[#allocation11] sm:$0xff] %v462
      %465 = vst [vmem:[#allocation11 + $0x8] sm:$0xff] %v463
    $region57: #{tpu_custom_call.1} parent=1 // pred_fallthru
      _
    %p466 = pnand %p83, %p441
    %p467 = pneg %p466
    // Predicated region
    $region58: #{tpu_custom_call.1} parent=1 // pred_check
      _
    $region59: #{tpu_custom_call.1} parent=1 // pred_check_branch
      %469 = sbr.rel (%p466) target = $region61
    $region60: #{tpu_custom_call.1} parent=1 // pred_region
      %v470 = vld [vmem:[#allocation2] sm:$0xff]
      %v471 = vld [vmem:[#allocation2 + $0x8] sm:$0xff]
      %v472 = vadd.f32 %v470, %v429
      %v473 = vadd.f32 %v471, %v432
      %v474 = vld [vmem:[%s6] sm:$0x1]
      %v476 = vlaneseq
      %v477 = vshrl.u32 %v476, 7
      %v478 = vsub.s32 0, %v477
      %v479 = vrot.slane %v474, %v478
      %v481 = vadd.f32 %v472, %v479
      %v482 = vadd.f32 %v473, %v479
      %483 = vst [vmem:[#allocation11] sm:$0xff] %v481
      %484 = vst [vmem:[#allocation11 + $0x8] sm:$0xff] %v482
    $region61: #{tpu_custom_call.1} parent=1 // pred_fallthru
      _
    // Predicated region
    $region62: #{tpu_custom_call.1} parent=1 // pred_check
      _
    $region63: #{tpu_custom_call.1} parent=1 // pred_check_branch
      %486 = sbr.rel (0) target = $region65
    $region64: #{tpu_custom_call.1} parent=1 // pred_region
      %s488 = ssub.s32 256, 256
      %489 = vsyncadd [#allocation5], %s488
      %s490 = sshll.u32 [#allocation11], 4
      %s491 = int_to_ptr.vmem [resolvable:$true] %s490
      %496 = dma.vmem_to_hbm [thread:$0]  %s491, 256, %s7, [#allocation5], 128, 128, 8
    $region65: #{tpu_custom_call.1} parent=1 // pred_fallthru
      _
    // Predicated region
    $region66: #{tpu_custom_call.1} parent=1 // pred_check
      _
    $region67: #{tpu_custom_call.1} parent=1 // pred_check_branch
      %498 = sbr.rel (0) target = $region69
    $region68: #{tpu_custom_call.1} parent=1 // pred_region
      %499 = dma.done [#allocation5], 256
    $region69: #{tpu_custom_call.1} parent=1 // pred_fallthru
      _
    %500 = vsyncpa [#allocation4], 1
    %501 = vsyncpa [#allocation7], 1
    %502 = vsyncpa [#allocation10], 1
    %503 = vsyncpa [#allocation5], 1

</llo_original>
